<compile_context>
chip_gen: v7x
topology: tpu7x:2x2x1
jax: 0.10.0
libtpu: 0.0.40
codegen_flags: <defaults>
</compile_context>

<pallas_src>
import jax
import jax.numpy as jnp
from jax import lax
from jax.experimental import pallas as pl
from jax.experimental.pallas import tpu as pltpu

# Contract x's K axis (2) with y's K axis (1); batch on axis 0.
_BATCH_DNUMS = (((2,), (1,)), ((0,), (0,)))


# ----------------------------- kernels ---------------------------------------
def _bmm_oneshot_kernel(x_ref, y_ref, o_ref):
    # Single K step: no accumulator, no init/finalize.
    o_ref[...] = lax.dot_general(
        x_ref[...], y_ref[...],
        dimension_numbers=_BATCH_DNUMS,
        preferred_element_type=jnp.float32,
    ).astype(o_ref.dtype)


def _bmm_acc_out_kernel(x_ref, y_ref, o_ref):
    # K tiled, f32 output: accumulate straight into the (VMEM-resident) output block.
    @pl.when(pl.program_id(3) == 0)
    def _():
        o_ref[...] = jnp.zeros_like(o_ref)

    o_ref[...] += lax.dot_general(
        x_ref[...], y_ref[...],
        dimension_numbers=_BATCH_DNUMS,
        preferred_element_type=jnp.float32,
    )


def _bmm_acc_scratch_kernel(x_ref, y_ref, o_ref, acc_ref):
    # K tiled, narrow output dtype: f32 scratch accumulator, cast at the end.
    @pl.when(pl.program_id(3) == 0)
    def _():
        acc_ref[...] = jnp.zeros_like(acc_ref)

    acc_ref[...] += lax.dot_general(
        x_ref[...], y_ref[...],
        dimension_numbers=_BATCH_DNUMS,
        preferred_element_type=jnp.float32,
    )

    @pl.when(pl.program_id(3) == pl.num_programs(3) - 1)
    def _():
        o_ref[...] = acc_ref[...].astype(o_ref.dtype)


# ----------------------------- helpers ----------------------------------------
def _tpu_hw_info():
    """Returns (mxu_edge, vmem_capacity_bytes) with conservative fallbacks."""
    kind = ""
    try:
        kind = jax.devices()[0].device_kind.lower()
    except Exception:
        pass
    # v6e / v7x have a 256-wide MXU; v5e and earlier are 128-wide.
    mxu_edge = 256 if ("v6" in kind or "v7" in kind) else 128
    vmem_cap = None
    try:
        info = pltpu.get_tpu_info()
        vmem_cap = int(getattr(info, "vmem_capacity_bytes", 0)) or None
    except Exception:
        vmem_cap = None
    if vmem_cap is None or vmem_cap <= 0:
        vmem_cap = (64 if "v7" in kind else 128) * 1024 * 1024
    return mxu_edge, vmem_cap


def _pick_tile(dim: int, cap: int, aligns) -> int:
    """Largest tile <= cap that divides `dim` and is a multiple of one of
    `aligns` (tried in preference order); falls back to the full dimension."""
    if dim <= cap:
        return dim
    for align in aligns:
        t = (cap // align) * align
        while t >= align:
            if dim % t == 0:
                return t
            t -= align
    # TODO(synk): no aligned divisor <= cap (prime-ish dim); full-dim fallback
    # may exceed the VMEM budget — an edge-masked cdiv grid would handle this.
    return dim


# ----------------------------- wrapper -----------------------------------------
def einsum_batch_matmul(x: jax.Array, y: jax.Array) -> jax.Array:
    """Computes einsum('bij,bjk->bik', x, y) with a Pallas TPU kernel."""
    assert x.ndim == 3 and y.ndim == 3, "expected x:(B,M,K), y:(B,K,N)"
    B, M, K = x.shape
    B2, K2, N = y.shape
    assert B == B2 and K == K2, "batch / contraction dims must match"
    out_dtype = jnp.result_type(x.dtype, y.dtype)
    # TODO(synk): integer inputs accumulate in f32 on the MXU, which differs
    # from PyTorch's exact integer einsum for large magnitudes.

    mxu_edge, vmem_cap = _tpu_hw_info()
    vmem_budget = vmem_cap // 2          # working-set budget (double-buffered)
    vmem_limit = (vmem_cap * 3) // 4     # scoped VMEM limit, headroom for scratch

    x_isz = jnp.dtype(x.dtype).itemsize
    y_isz = jnp.dtype(y.dtype).itemsize
    o_isz = jnp.dtype(out_dtype).itemsize
    align_m = max(8, 32 // x_isz)        # sublane alignment, dtype-aware
    lane_aligns = (mxu_edge, 128)        # prefer full-MXU-edge multiples

    def vmem_bytes(tb, tm, tk, tn):
        # double-buffered x / y / out blocks + (conservatively) one f32 accumulator
        dbl = 2 * tb * (tm * tk * x_isz + tk * tn * y_isz + tm * tn * o_isz)
        return dbl + tb * tm * tn * 4

    # Tile caps: grow K first (amortizes the accumulator RMW sweep), keep the
    # output lane dim (N) a dense multiple of the MXU edge.
    cap_m, cap_k, cap_n = 512, 2048, 2048
    while True:
        tm = _pick_tile(M, cap_m, (align_m,))
        tk = _pick_tile(K, cap_k, lane_aligns)
        tn = _pick_tile(N, cap_n, lane_aligns)
        if vmem_bytes(1, tm, tk, tn) <= vmem_budget:
            break
        if cap_n > mxu_edge:
            cap_n //= 2
        elif cap_m > align_m:
            cap_m //= 2
        elif cap_k > mxu_edge:
            cap_k //= 2
        else:
            break  # accept; pathological shapes may spill

    # Batch blocking: only when a single tile already covers M, N and K
    # (per-step compute is tiny), and never collapse the parallel grid to a
    # single step (keep >=2 steps so both v7x TensorCores get work).
    tb = 1
    if M <= tm and N <= tn and K <= tk and B > 1:
        max_tb = max(1, B // 2)
        for cand in range(min(B, max_tb, 64), 0, -1):
            if B % cand == 0 and vmem_bytes(cand, tm, tk, tn) <= vmem_budget:
                tb = cand
                break

    # Make sure the scoped limit covers the chosen working set (+ headroom).
    vmem_limit = max(
        vmem_limit,
        min(vmem_bytes(tb, tm, tk, tn) + (8 << 20), vmem_cap - (4 << 20)),
    )
    vmem_limit = int(min(vmem_limit, vmem_cap))

    if K <= tk:
        # ------------------ single K step: one-shot matmul -------------------
        # Put the axis over which the LARGER operand block is invariant
        # innermost, so Pallas keeps that block resident and skips its DMA.
        if tm * tk * x_isz >= tk * tn * y_isz:
            grid = (B // tb, M // tm, N // tn)          # n innermost: reuse x
            x_map = lambda b, m, n: (b, m, 0)
            y_map = lambda b, m, n: (b, 0, n)
            o_map = lambda b, m, n: (b, m, n)
        else:
            grid = (B // tb, N // tn, M // tm)          # m innermost: reuse y
            x_map = lambda b, n, m: (b, m, 0)
            y_map = lambda b, n, m: (b, 0, n)
            o_map = lambda b, n, m: (b, m, n)

        return pl.pallas_call(
            _bmm_oneshot_kernel,
            out_shape=jax.ShapeDtypeStruct((B, M, N), out_dtype),
            grid_spec=pltpu.PrefetchScalarGridSpec(
                num_scalar_prefetch=0,
                grid=grid,
                in_specs=[
                    pl.BlockSpec((tb, tm, K), x_map),
                    pl.BlockSpec((tb, K, tn), y_map),
                ],
                out_specs=pl.BlockSpec((tb, tm, tn), o_map),
            ),
            compiler_params=pltpu.CompilerParams(
                dimension_semantics=("parallel", "parallel", "parallel"),
                vmem_limit_bytes=vmem_limit,
            ),
        )(x, y)

    # -------------------- K tiled: reduction axis last --------------------------
    grid = (B // tb, M // tm, N // tn, K // tk)
    x_spec = pl.BlockSpec((tb, tm, tk), lambda b, m, n, k: (b, m, k))
    y_spec = pl.BlockSpec((tb, tk, tn), lambda b, m, n, k: (b, k, n))
    o_spec = pl.BlockSpec((tb, tm, tn), lambda b, m, n, k: (b, m, n))

    if jnp.dtype(out_dtype) == jnp.dtype(jnp.float32):
        kernel = _bmm_acc_out_kernel        # accumulate directly into the output block
        scratch = []
    else:
        kernel = _bmm_acc_scratch_kernel    # narrow output: keep the f32 scratch
        scratch = [pltpu.VMEM((tb, tm, tn), jnp.float32)]

    return pl.pallas_call(
        kernel,
        out_shape=jax.ShapeDtypeStruct((B, M, N), out_dtype),
        grid_spec=pltpu.PrefetchScalarGridSpec(
            num_scalar_prefetch=0,
            grid=grid,
            in_specs=[x_spec, y_spec],
            out_specs=o_spec,
            scratch_shapes=scratch,
        ),
        compiler_params=pltpu.CompilerParams(
            dimension_semantics=("parallel", "parallel", "parallel", "arbitrary"),
            vmem_limit_bytes=vmem_limit,
        ),
    )(x, y)


if __name__ == "__main__":
    key = jax.random.PRNGKey(0)
    kx, ky = jax.random.split(key)

    # Small shapes consistent with 'bij,bjk->bik'; N=128 keeps the output
    # lane dimension dense (unmasked stores).
    B, M, K, N = 2, 16, 32, 128
    x = jax.random.normal(kx, (B, M, K), dtype=jnp.float32)
    y = jax.random.normal(ky, (B, K, N), dtype=jnp.float32)

    out = einsum_batch_matmul(x, y)
    out = jax.block_until_ready(out)

    # correctness check against plain-JAX reference
    ref = jnp.einsum("bij,bjk->bik", x, y)
    assert out.shape == (B, M, N)
    assert jnp.allclose(out, ref, atol=1e-4, rtol=1e-4)

    print("KERNEL_OK")
</pallas_src>

<mosaic_0001>
module attributes {stable_mosaic.version = 11 : i64} {
  func.func @_bmm_oneshot_kernel(%arg0: i32, %arg1: i32, %arg2: i32, %arg3: memref<1x16x32xf32, #tpu.memory_space<vmem>>, %arg4: memref<1x32x128xf32, #tpu.memory_space<vmem>>, %arg5: memref<1x16x128xf32, #tpu.memory_space<vmem>>) attributes {dimension_semantics = [#tpu.dimension_semantics<parallel>, #tpu.dimension_semantics<parallel>, #tpu.dimension_semantics<parallel>], iteration_bounds = array<i64: 2, 1, 1>, scalar_prefetch = 0 : i64, scratch_operands = 0 : i64, tpu.core_type = #tpu.core_type<tc>, window_params = [{transform_indices = @transform_0, window_bounds = array<i64: 1, 16, 32>}, {transform_indices = @transform_1, window_bounds = array<i64: 1, 32, 128>}, {transform_indices = @transform_2, window_bounds = array<i64: 1, 16, 128>}]} {
    %c0 = arith.constant 0 : index
    %c0_0 = arith.constant 0 : index
    %c0_1 = arith.constant 0 : index
    %0 = vector.load %arg3[%c0, %c0_0, %c0_1] : memref<1x16x32xf32, #tpu.memory_space<vmem>>, vector<1x16x32xf32>
    %c0_2 = arith.constant 0 : index
    %c0_3 = arith.constant 0 : index
    %c0_4 = arith.constant 0 : index
    %1 = vector.load %arg4[%c0_2, %c0_3, %c0_4] : memref<1x32x128xf32, #tpu.memory_space<vmem>>, vector<1x32x128xf32>
    %cst = arith.constant dense<0.000000e+00> : vector<1x16x128xf32>
    %2 = tpu.matmul %0, %1, %cst {dimension_numbers = #tpu.dot_dimension_numbers<[2], [1], [1], [2], [0, 0, 0, 1, 1, 2], [0], [0]>} : vector<1x16x32xf32>, vector<1x32x128xf32>, vector<1x16x128xf32> -> vector<1x16x128xf32>
    %c0_5 = arith.constant 0 : index
    %c0_6 = arith.constant 0 : index
    %c0_7 = arith.constant 0 : index
    %3 = vector.load %arg5[%c0_5, %c0_6, %c0_7] : memref<1x16x128xf32, #tpu.memory_space<vmem>>, vector<1x16x128xf32>
    tpu.vector_store %arg5[%c0_5, %c0_6, %c0_7], %2 {strides = array<i32>} : memref<1x16x128xf32, #tpu.memory_space<vmem>>, vector<1x16x128xf32>,
    return
  }
  func.func @transform_0(%arg0: i32, %arg1: i32, %arg2: i32) -> (i32, i32, i32) {
    %c0_i32 = arith.constant 0 : i32
    %c0_i32_0 = arith.constant 0 : i32
    return %arg0, %arg2, %c0_i32 : i32, i32, i32
  }
  func.func @transform_1(%arg0: i32, %arg1: i32, %arg2: i32) -> (i32, i32, i32) {
    %c0_i32 = arith.constant 0 : i32
    %c0_i32_0 = arith.constant 0 : i32
    return %arg0, %c0_i32, %arg1 : i32, i32, i32
  }
  func.func @transform_2(%arg0: i32, %arg1: i32, %arg2: i32) -> (i32, i32, i32) {
    %c0_i32 = arith.constant 0 : i32
    return %arg0, %arg2, %arg1 : i32, i32, i32
  }
}

</mosaic_0001>

<llo_original>
// kernel: tpu_custom_call.1
$region0: #{tpu_custom_call.1}
  #allocation0 [shape = 'u32[]', space=smem, size = 0x4, offset = 0x4, fixed_abs, tag = 'smem constant byte address 0x4 - core index']
  #allocation1 [shape = 'u32[144,128]{1,0:T(1,128)}', space=vmem, size = 0x12000, scoped, tag = 'internal scratch']
  %s0 = inlined_call_operand.hbm [shape: f32[2,16,32], index: 0, kind: input, shape index: {}]
  %s1 = inlined_call_operand.hbm [shape: f32[2,32,128], index: 1, kind: input, shape index: {}]
  %s2 = inlined_call_operand.hbm [shape: f32[2,16,128], index: 2, kind: output, shape index: {}]
  %s3 = sld [smem:[#allocation0]]
  $region49: #{tpu_custom_call.1} parent=0
    _
  %s5 = ssub.s32 1, %s3
  %s6 = scalar_select 0, %s5, %s3
  $region1: #{tpu_custom_call.1} parent=0
    #allocation2 [shape = 'u8[16384]{0}', space=vmem, size = 0x4000, scoped, tag = 'input window, operand 0']
    #allocation3 [shape = 's32[2]{0}', space=sflag, size = 0x8, scoped, tag = 'scoped memory for tpu_custom_call.1']
    #allocation4 [shape = 's32[2]{0}', space=sflag, size = 0x8, scoped, tag = 'scoped memory for tpu_custom_call.1']
    #allocation5 [shape = 'u8[32768]{0}', space=vmem, size = 0x8000, scoped, tag = 'input window, operand 1']
    #allocation6 [shape = 's32[2]{0}', space=sflag, size = 0x8, scoped, tag = 'scoped memory for tpu_custom_call.1']
    #allocation7 [shape = 'u8[16384]{0}', space=vmem, size = 0x4000, scoped, tag = 'output window, operand 0']
    %7 = vsyncpa [#allocation3], 0
    %s8 = scalar_lea.sflag [#allocation3], 1
    %9 = vsyncpa %s8, 0
    %10 = vsyncpa [#allocation6], 0
    %s11 = scalar_lea.sflag [#allocation6], 1
    %12 = vsyncpa %s11, 0
    %13 = vsyncpa [#allocation4], 0
    %s14 = scalar_lea.sflag [#allocation4], 1
    %15 = vsyncpa %s14, 0
    loop: start=0, step=1, limit=4
    $region2: #{tpu_custom_call.1} parent=1 // loop_pre_header
      _
    $region3: #{tpu_custom_call.1} parent=1 // loop_header
      %s17 = sphi 0, %s21
      %p18 = scmp.ge.s32.totalorder %s17, 4
      %s24 = sphi 0, %s43
      %s25 = sphi 0, %s39
      %s26 = sphi 0, %s35
      %s27 = sphi 0, %s24
      %s28 = sphi 0, %s25
      %s29 = sphi 0, %s26
      %s30 = sphi 0, %s27
      %s31 = sphi 0, %s28
      %s32 = sphi 0, %s29
      %s48 = sphi 0, %s50
      %s51 = sphi 0, %s48
      %s52 = sphi 0, %s51
      %s68 = sphi 0, %s52
      %s76 = sphi 0, %s78
      %s79 = sphi 0, %s76
      %s80 = sphi 0, %s79
      %s96 = sphi 0, %s80
      %s106 = sphi 0, %s108
      %s109 = sphi 0, %s106
      %s110 = sphi 0, %s109
      %s126 = sphi 0, %s110
    $region4: #{tpu_custom_call.1} parent=1 // loop_header_branch
      %20 = sbr.rel (%p18) target = $region8
    $region5: #{tpu_custom_call.1} parent=1 // loop_body
      %s22 = ssub.s32 %s17, 1
      %s23 = ssub.s32 %s17, 2
      %s33 = sadd.s32 1, %s26
      %p34 = scmp.ge.s32.totalorder %s33, 1
      %s35 = scalar_select %p34, 0, %s33
      %s36 = sadd.s32 1, %s25
      %s37 = scalar_select %p34, %s36, %s25
      %p38 = scmp.ge.s32.totalorder %s37, 1
      %s39 = scalar_select %p38, 0, %s37
      %s40 = sadd.s32 1, %s24
      %s41 = scalar_select %p38, %s40, %s24
      %p42 = scmp.ge.s32.totalorder %s41, 2
      %s43 = scalar_select %p42, 0, %s41
      %s44 = ssub.s32 %s24, %s43
      %s45 = ssub.s32 %s26, %s35
      %s46 = sor.u32 %s44, %s45
      %p47 = scmp.eq.s32.totalorder %s46, 0
      %s49 = sadd.s32 %s48, 1
      %s50 = scalar_select %p47, %s48, %s49
      %p53 = pneg %p47
      %p54 = scmp.eq.s32.totalorder %s17, 1
      %p55 = por %p53, %p54
      %p56 = scmp.ne.s32.totalorder %s48, %s51
      %p57 = scmp.eq.s32.totalorder %s17, 0
      %p58 = por %p56, %p57
      %p59 = scmp.ne.s32.totalorder %s48, %s51
      %p60 = scmp.eq.s32.totalorder %s22, 1
      %p61 = por %p59, %p60
      %p62 = scmp.ne.s32.totalorder %s51, %s52
      %p63 = scmp.eq.s32.totalorder %s22, 0
      %p64 = por %p62, %p63
      %p65 = scmp.ne.s32.totalorder %s51, %s52
      %p66 = scmp.eq.s32.totalorder %s23, 1
      %p67 = por %p65, %p66
      %p69 = scmp.ne.s32.totalorder %s52, %s68
      %p70 = scmp.eq.s32.totalorder %s23, 0
      %p71 = por %p69, %p70
      %s72 = ssub.s32 %s24, %s43
      %s73 = ssub.s32 %s25, %s39
      %s74 = sor.u32 %s72, %s73
      %p75 = scmp.eq.s32.totalorder %s74, 0
      %s77 = sadd.s32 %s76, 1
      %s78 = scalar_select %p75, %s76, %s77
      %p81 = pneg %p75
      %p82 = scmp.eq.s32.totalorder %s17, 1
      %p83 = por %p81, %p82
      %p84 = scmp.ne.s32.totalorder %s76, %s79
      %p85 = scmp.eq.s32.totalorder %s17, 0
      %p86 = por %p84, %p85
      %p87 = scmp.ne.s32.totalorder %s76, %s79
      %p88 = scmp.eq.s32.totalorder %s22, 1
      %p89 = por %p87, %p88
      %p90 = scmp.ne.s32.totalorder %s79, %s80
      %p91 = scmp.eq.s32.totalorder %s22, 0
      %p92 = por %p90, %p91
      %p93 = scmp.ne.s32.totalorder %s79, %s80
      %p94 = scmp.eq.s32.totalorder %s23, 1
      %p95 = por %p93, %p94
      %p97 = scmp.ne.s32.totalorder %s80, %s96
      %p98 = scmp.eq.s32.totalorder %s23, 0
      %p99 = por %p97, %p98
      %s100 = ssub.s32 %s24, %s43
      %s101 = ssub.s32 %s26, %s35
      %s102 = sor.u32 %s100, %s101
      %s103 = ssub.s32 %s25, %s39
      %s104 = sor.u32 %s102, %s103
      %p105 = scmp.eq.s32.totalorder %s104, 0
      %s107 = sadd.s32 %s106, 1
      %s108 = scalar_select %p105, %s106, %s107
      %p111 = pneg %p105
      %p112 = scmp.eq.s32.totalorder %s17, 1
      %p113 = por %p111, %p112
      %p114 = scmp.ne.s32.totalorder %s106, %s109
      %p115 = scmp.eq.s32.totalorder %s17, 0
      %p116 = por %p114, %p115
      %p117 = scmp.ne.s32.totalorder %s106, %s109
      %p118 = scmp.eq.s32.totalorder %s22, 1
      %p119 = por %p117, %p118
      %p120 = scmp.ne.s32.totalorder %s109, %s110
      %p121 = scmp.eq.s32.totalorder %s22, 0
      %p122 = por %p120, %p121
      %p123 = scmp.ne.s32.totalorder %s109, %s110
      %p124 = scmp.eq.s32.totalorder %s23, 1
      %p125 = por %p123, %p124
      %p127 = scmp.ne.s32.totalorder %s110, %s126
      %p128 = scmp.eq.s32.totalorder %s23, 0
      %p129 = por %p127, %p128
      %p130 = scmp.le.s32.totalorder 1, %s17
      %p131 = scmp.lt.s32.totalorder %s17, 3
      %p132 = pnand %p130, %p131
      %p133 = pneg %p132
      // Predicated region
      $region9: #{tpu_custom_call.1} parent=5 // pred_check
        _
      $region10: #{tpu_custom_call.1} parent=5 // pred_check_branch
        %135 = sbr.rel (%p132) target = $region12
      $region11: #{tpu_custom_call.1} parent=5 // pred_region
        %s136 = ssub.s32 %s17, 1
      $region12: #{tpu_custom_call.1} parent=5 // pred_fallthru
        _
      %p137 = scmp.lt.s32.totalorder %s17, 2
      // Predicated region
      $region13: #{tpu_custom_call.1} parent=5 // pred_check
        %p138 = pneg %p137
      $region14: #{tpu_custom_call.1} parent=5 // pred_check_branch
        %140 = sbr.rel (%p138) target = $region16
      $region15: #{tpu_custom_call.1} parent=5 // pred_region
        // Predicated region
        $region17: #{tpu_custom_call.1} parent=15 // pred_check
          %p141 = pneg %p58
        $region18: #{tpu_custom_call.1} parent=15 // pred_check_branch
          %143 = sbr.rel (%p141) target = $region20
        $region19: #{tpu_custom_call.1} parent=15 // pred_region
          %s144 = sand.u32 %s48, 1
          %s145 = scalar_lea.sflag [#allocation3], %s144
          %s146 = sand.u32 %s48, 1
          %s147 = smul.addr %s146, 16
          %s148 = scalar_lea.vmem [#allocation2], %s147
          %s149 = smul.u32 2, %s26
          %s151 = ssub.s32 256, 256
          %152 = vsyncadd %s145, %s151
          %s153 = smul.addr %s24, 2
          %s154 = sadd.s32 %s149, %s153
          %s155 = smul.addr %s154, 128
          %s156 = scalar_lea.hbm %s0, %s155
          %s157 = sshll.u32 %s148, 4
          %s158 = int_to_ptr.vmem [resolvable:$true] %s157
          %163 = dma.hbm_to_vmem [thread:$0]  %s156, 256, %s158, %s145, 128, 128, 8
        $region20: #{tpu_custom_call.1} parent=15 // pred_fallthru
          _
        // Predicated region
        $region21: #{tpu_custom_call.1} parent=15 // pred_check
          %p164 = pneg %p86
        $region22: #{tpu_custom_call.1} parent=15 // pred_check_branch
          %166 = sbr.rel (%p164) target = $region24
        $region23: #{tpu_custom_call.1} parent=15 // pred_region
          %s167 = sand.u32 %s76, 1
          %s168 = scalar_lea.sflag [#allocation6], %s167
          %s169 = sand.u32 %s76, 1
          %s170 = smul.addr %s169, 32
          %s171 = scalar_lea.vmem [#allocation5], %s170
          %s173 = ssub.s32 512, 512
          %174 = vsyncadd %s168, %s173
          %s175 = smul.addr %s24, 4
          %s176 = sadd.s32 %s25, %s175
          %s177 = smul.addr %s176, 128
          %s178 = scalar_lea.hbm %s1, %s177
          %s179 = sshll.u32 %s171, 4
          %s180 = int_to_ptr.vmem [resolvable:$true] %s179
          %185 = dma.hbm_to_vmem [thread:$0]  %s178, 512, %s180, %s168, 128, 128, 8
        $region24: #{tpu_custom_call.1} parent=15 // pred_fallthru
          _
      $region16: #{tpu_custom_call.1} parent=5 // pred_fallthru
        _
      %p186 = scmp.le.s32.totalorder 1, %s17
      %p187 = scmp.lt.s32.totalorder %s17, 3
      %p188 = pnand %p186, %p187
      %p189 = pneg %p188
      // Predicated region
      $region25: #{tpu_custom_call.1} parent=5 // pred_check
        _
      $region26: #{tpu_custom_call.1} parent=5 // pred_check_branch
        %191 = sbr.rel (%p188) target = $region28
      $region27: #{tpu_custom_call.1} parent=5 // pred_region
        %s192 = ssub.s32 %s17, 1
        %s193 = sand.u32 %s51, 1
        %s194 = scalar_lea.sflag [#allocation3], %s193
        %s195 = sand.u32 %s51, 1
        %s196 = smul.addr %s195, 16
        %s197 = scalar_lea.vmem [#allocation2], %s196
        // Predicated region
        $region29: #{tpu_custom_call.1} parent=27 // pred_check
          %p198 = pneg %p64
        $region30: #{tpu_custom_call.1} parent=27 // pred_check_branch
          %200 = sbr.rel (%p198) target = $region32
        $region31: #{tpu_custom_call.1} parent=27 // pred_region
          %201 = dma.done %s194, 256
        $region32: #{tpu_custom_call.1} parent=27 // pred_fallthru
          _
        %s202 = sand.u32 %s79, 1
        %s203 = scalar_lea.sflag [#allocation6], %s202
        %s204 = sand.u32 %s79, 1
        %s205 = smul.addr %s204, 32
        %s206 = scalar_lea.vmem [#allocation5], %s205
        // Predicated region
        $region33: #{tpu_custom_call.1} parent=27 // pred_check
          %p207 = pneg %p92
        $region34: #{tpu_custom_call.1} parent=27 // pred_check_branch
          %209 = sbr.rel (%p207) target = $region36
        $region35: #{tpu_custom_call.1} parent=27 // pred_region
          %210 = dma.done %s203, 512
        $region36: #{tpu_custom_call.1} parent=27 // pred_fallthru
          _
        %s211 = sand.u32 %s51, 1
        %s212 = scalar_lea.sflag [#allocation3], %s211
        %s213 = sand.u32 %s51, 1
        %s214 = smul.addr %s213, 16
        %s215 = scalar_lea.vmem [#allocation2], %s214
        %p216 = pneg %p64
        %p217 = pneg %p61
        %s218 = sand.u32 %s79, 1
        %s219 = scalar_lea.sflag [#allocation6], %s218
        %s220 = sand.u32 %s79, 1
        %s221 = smul.addr %s220, 32
        %s222 = scalar_lea.vmem [#allocation5], %s221
        %p223 = pneg %p92
        %p224 = pneg %p89
        %p225 = pneg %p122
        %p226 = pneg %p119
        %s227 = sand.u32 %s109, 1
        %s228 = scalar_lea.sflag [#allocation4], %s227
        %s229 = sand.u32 %s109, 1
        %s230 = smul.addr %s229, 16
        %s231 = scalar_lea.vmem [#allocation7], %s230
        %s232 = smul.u32 2, %s29
        %s233 = smul.u32 2, %s29
        %v234 = vld [vmem:[%s197] sm:$0xff]
        %v235 = vld [vmem:[%s197 + $0x8] sm:$0xff]
        %v236 = vld [vmem:[%s206] sm:$0xff]
        %v237 = vld [vmem:[%s206 + $0x8] sm:$0xff]
        %v238 = vld [vmem:[%s206 + $0x10] sm:$0xff]
        %v239 = vld [vmem:[%s206 + $0x18] sm:$0xff]
        %vm240 = vcmask 261120
        %v242 = vsel %vm240, %v234, 0
        %v245 = vsel %vm240, %v235, 0
        %247 = vmatprep.subr.mxu0 0.0
        %248 = vmatpush1.msra.mxu0 %v236
        %249 = vmatprep.subr.mxu0 0.0
        %250 = vmatpush1.msra.mxu0 %v237
        %251 = vmatprep.subr.mxu0 0.0
        %252 = vmatpush1.msra.mxu0 %v238
        %253 = vmatprep.subr.mxu0 0.0
        %254 = vmatpush1.msra.mxu0 %v239
        %255 = vmatprep.subr.mxu0 0.0
        %256 = vmatpush1.msra.mxu0 0.0
        %257 = vmatprep.subr.mxu0 0.0
        %258 = vmatpush1.msra.mxu0 0.0
        %259 = vmatprep.subr.mxu0 0.0
        %260 = vmatpush1.msra.mxu0 0.0
        %261 = vmatprep.subr.mxu0 0.0
        %262 = vmatpush1.msra.mxu0 0.0
        %263 = vmatprep.subr.mxu0 0.0
        %264 = vmatpush1.msra.mxu0 0.0
        %265 = vmatprep.subr.mxu0 0.0
        %266 = vmatpush1.msra.mxu0 0.0
        %267 = vmatprep.subr.mxu0 0.0
        %268 = vmatpush1.msra.mxu0 0.0
        %269 = vmatprep.subr.mxu0 0.0
        %270 = vmatpush1.msra.mxu0 0.0
        %271 = vmatprep.subr.mxu0 0.0
        %272 = vmatpush1.msra.mxu0 0.0
        %273 = vmatprep.subr.mxu0 0.0
        %274 = vmatpush1.msra.mxu0 0.0
        %275 = vmatprep.subr.mxu0 0.0
        %276 = vmatpush1.msra.mxu0 0.0
        %277 = vmatprep.subr.mxu0 0.0
        %278 = vmatpush1.msra.mxu0 0.0
        %279 = vmatprep.subr.mxu0 0.0
        %280 = vmatpush1.msra.mxu0 0.0
        %281 = vmatprep.subr.mxu0 0.0
        %282 = vmatpush1.msra.mxu0 0.0
        %283 = vmatprep.subr.mxu0 0.0
        %284 = vmatpush1.msra.mxu0 0.0
        %285 = vmatprep.subr.mxu0 0.0
        %286 = vmatpush1.msra.mxu0 0.0
        %287 = vmatprep.subr.mxu0 0.0
        %288 = vmatpush1.msra.mxu0 0.0
        %289 = vmatprep.subr.mxu0 0.0
        %290 = vmatpush1.msra.mxu0 0.0
        %291 = vmatprep.subr.mxu0 0.0
        %292 = vmatpush1.msra.mxu0 0.0
        %293 = vmatprep.subr.mxu0 0.0
        %294 = vmatpush1.msra.mxu0 0.0
        %295 = vmatprep.subr.mxu0 0.0
        %296 = vmatpush1.msra.mxu0 0.0
        %297 = vmatprep.subr.mxu0 0.0
        %298 = vmatpush1.msra.mxu0 0.0
        %299 = vmatprep.subr.mxu0 0.0
        %300 = vmatpush1.msra.mxu0 0.0
        %301 = vmatprep.subr.mxu0 0.0
        %302 = vmatpush1.msra.mxu0 0.0
        %303 = vmatprep.subr.mxu0 0.0
        %304 = vmatpush1.msra.mxu0 0.0
        %305 = vmatprep.subr.mxu0 0.0
        %306 = vmatpush1.msra.mxu0 0.0
        %307 = vmatprep.subr.mxu0 0.0
        %308 = vmatpush1.msra.mxu0 0.0
        %309 = vmatprep.subr.mxu0 0.0
        %310 = vmatpush1.msra.mxu0 0.0
        %311 = vmatprep.mubr.f32.mxu0 0.0
        %312 = vmatmul.mubr.f32.gmra.mrb[0].mxu0 %v242
        %v313 = vpop.f32.mrb[0].mxu0
        %v314 = vadd.f32 0.0, %v313
        %v315 = vpop.f32.mrb[0].mxu0
        %316 = vmatprep.mubr.f32.mxu0 0.0
        %317 = vmatmul.mubr.f32.gmra.mrb[0].mxu0 %v245
        %v318 = vpop.f32.mrb[0].mxu0
        %v319 = vadd.f32 0.0, %v318
        %v320 = vpop.f32.mrb[0].mxu0
        %321 = vdwg.mxu0
        %322 = vst [vmem:[%s231] sm:$0xff] %v314
        %323 = vst [vmem:[%s231 + $0x8] sm:$0xff] %v319
        %s324 = sand.u32 %s109, 1
        %s325 = scalar_lea.sflag [#allocation4], %s324
        %s326 = sand.u32 %s109, 1
        %s327 = smul.addr %s326, 16
        %s328 = scalar_lea.vmem [#allocation7], %s327
        // Predicated region
        $region37: #{tpu_custom_call.1} parent=27 // pred_check
          %p329 = pneg %p119
        $region38: #{tpu_custom_call.1} parent=27 // pred_check_branch
          %331 = sbr.rel (%p329) target = $region40
        $region39: #{tpu_custom_call.1} parent=27 // pred_region
          %s332 = smul.u32 2, %s29
          %s334 = ssub.s32 256, 256
          %335 = vsyncadd %s325, %s334
          %s336 = sadd.s32 %s28, %s332
          %s337 = smul.addr %s27, 2
          %s338 = sadd.s32 %s336, %s337
          %s339 = smul.addr %s338, 128
          %s340 = scalar_lea.hbm %s2, %s339
          %s341 = sshll.u32 %s328, 4
          %s342 = int_to_ptr.vmem [resolvable:$true] %s341
          %347 = dma.vmem_to_hbm [thread:$0]  %s342, 256, %s340, %s325, 128, 128, 8
        $region40: #{tpu_custom_call.1} parent=27 // pred_fallthru
          _
      $region28: #{tpu_custom_call.1} parent=5 // pred_fallthru
        _
      %p348 = scmp.le.s32.totalorder 2, %s17
      // Predicated region
      $region41: #{tpu_custom_call.1} parent=5 // pred_check
        %p349 = pneg %p348
      $region42: #{tpu_custom_call.1} parent=5 // pred_check_branch
        %351 = sbr.rel (%p349) target = $region44
      $region43: #{tpu_custom_call.1} parent=5 // pred_region
        %s352 = ssub.s32 %s17, 2
        // Predicated region
        $region45: #{tpu_custom_call.1} parent=43 // pred_check
          %p353 = pneg %p125
        $region46: #{tpu_custom_call.1} parent=43 // pred_check_branch
          %355 = sbr.rel (%p353) target = $region48
        $region47: #{tpu_custom_call.1} parent=43 // pred_region
          %s356 = sand.u32 %s110, 1
          %s357 = scalar_lea.sflag [#allocation4], %s356
          %s358 = sand.u32 %s110, 1
          %s359 = smul.addr %s358, 16
          %s360 = scalar_lea.vmem [#allocation7], %s359
          %361 = dma.done %s357, 256
        $region48: #{tpu_custom_call.1} parent=43 // pred_fallthru
          _
      $region44: #{tpu_custom_call.1} parent=5 // pred_fallthru
        _
    $region6: #{tpu_custom_call.1} parent=1 // loop_footer
      %s21 = sadd.s32 1, %s17
    $region7: #{tpu_custom_call.1} parent=1 // loop_footer_branch
      %16 = sbr.rel target = $region3
    $region8: #{tpu_custom_call.1} parent=1 // loop_exit
      _
    %362 = vsyncpa [#allocation3], 1
    %s363 = scalar_lea.sflag [#allocation3], 1
    %364 = vsyncpa %s363, 1
    %365 = vsyncpa [#allocation6], 1
    %s366 = scalar_lea.sflag [#allocation6], 1
    %367 = vsyncpa %s366, 1
    %368 = vsyncpa [#allocation4], 1
    %s369 = scalar_lea.sflag [#allocation4], 1
    %370 = vsyncpa %s369, 1

</llo_original>
